<compile_context>
chip_gen: v6e
topology: v6e:2x2x1
jax: 0.10.0
libtpu: 0.0.40
codegen_flags: <defaults>
</compile_context>

<pallas_src>
import functools
import math

import jax
import jax.numpy as jnp
from jax.experimental import pallas as pl
from jax.experimental.pallas import tpu as pltpu

_BN_EPS = 1e-5
_LANE = 128


def _round_up(x, m):
    return (x + m - 1) // m * m


def _next_pow2(x):
    x = int(x)
    return 1 << max(x - 1, 0).bit_length()


def _sublane(dtype):
    # native sublane tile: 8 rows for 4-byte dtypes, 16 for 2-byte dtypes
    return 8 * (4 // jnp.dtype(dtype).itemsize)


# -----------------------------------------------------------------------------
# Fused kernel: all residual blocks + final linear in a single pallas_call.
# -----------------------------------------------------------------------------
def _fused_kernel(*refs, n_blocks, seg_off, seg_w, bn, tanh_output, tanh_bf16,
                  b_real, rows_per_tile, prefetch_weights):
    # refs = inputs  [x, (w, b, gamma, beta) * n_blocks, final_w, final_b]
    #        outputs [o]
    #        scratch [act, (w_buf_0..w_buf_{n-1}, fw_buf, dma_sem) if prefetch]
    n_in = 3 + 4 * n_blocks
    x_ref = refs[0]
    blk_refs = refs[1:1 + 4 * n_blocks]
    fw_ref = refs[1 + 4 * n_blocks]
    fb_ref = refs[2 + 4 * n_blocks]
    o_ref = refs[n_in]
    s_ref = refs[n_in + 1]                    # persistent VMEM activation scratch

    if prefetch_weights:
        w_bufs = refs[n_in + 2:n_in + 2 + n_blocks]
        fw_buf = refs[n_in + 2 + n_blocks]
        dma_sem = refs[n_in + 3 + n_blocks]
        # Issue every weight HBM->VMEM DMA up front; each is waited on right
        # before its matmul so the loads hide behind earlier blocks' MXU work.
        w_copies = []
        for k in range(n_blocks):
            cp = pltpu.make_async_copy(blk_refs[4 * k], w_bufs[k], dma_sem.at[k])
            cp.start()
            w_copies.append(cp)
        fw_copy = pltpu.make_async_copy(fw_ref, fw_buf, dma_sem.at[n_blocks])
        fw_copy.start()

    def _weight(k):
        if prefetch_weights:
            w_copies[k].wait()
            return w_bufs[k][...]
        return blk_refs[4 * k][...]

    def _final_weight():
        if prefetch_weights:
            fw_copy.wait()
            return fw_buf[...]
        return fw_ref[...]

    act_dtype = s_ref.dtype
    # BN invariant: stats divide by b_real, so padded batch rows must contribute
    # exactly zero to every pre-BN h.  Holds because padded input rows are zero,
    # the Linear bias is dropped when bn=True, and the epilogue below re-zeroes
    # padded rows before they are written back to the scratch.
    need_mask = bn and (rows_per_tile != b_real)
    if need_mask:
        rows = jax.lax.broadcasted_iota(jnp.int32, (rows_per_tile, 1), 0)
        row_bool = rows < b_real
        row_mask = row_bool.astype(jnp.float32)

    # Stage the (already lane/row padded) input at the head of the scratch.
    s_ref[:, :seg_w[0]] = x_ref[...]
    inv_b = 1.0 / float(b_real)

    for k in range(n_blocks):                 # static Python loop -> unrolled
        in_w = seg_off[k + 1]                 # everything written so far
        out_off, out_w = seg_off[k + 1], seg_w[k + 1]
        _, b_ref, g_ref, bt_ref = blk_refs[4 * k:4 * k + 4]

        # Linear on the MXU, f32 accumulation.  Static ref slices are free.
        h = jnp.dot(s_ref[:, :in_w], _weight(k),
                    preferred_element_type=jnp.float32)

        if bn:
            # Training-mode BatchNorm1d (biased variance), centered two-pass
            # statistics in f32, folded into one scale/shift.
            mean = jnp.sum(h, axis=0, keepdims=True) * inv_b
            hc = h - mean
            if need_mask:
                hc = hc * row_mask            # keep padded rows out of the stats
            var = jnp.sum(hc * hc, axis=0, keepdims=True) * inv_b
            scale = g_ref[...] * jax.lax.rsqrt(var + _BN_EPS)
            act = hc * scale + bt_ref[...]
        else:
            act = h + b_ref[...]

        # Fused epilogue: ReLU + padded-row mask + dtype cast in one select.
        keep = act > 0.0
        if need_mask:
            keep = jnp.logical_and(keep, row_bool)
        # Append-only "concat": tile-aligned store into the scratch tail.
        s_ref[:, out_off:out_off + out_w] = (
            jnp.where(keep, act, 0.0).astype(act_dtype))

    out = jnp.dot(s_ref[...], _final_weight(),
                  preferred_element_type=jnp.float32) + fb_ref[...]
    if tanh_output:
        if tanh_bf16:
            # bf16 EUP tanh on v6e/v7x: halves the transcendental work.
            out = jnp.tanh(out.astype(jnp.bfloat16)).astype(jnp.float32)
        else:
            out = jnp.tanh(out)
    o_ref[...] = out.astype(o_ref.dtype)


# -----------------------------------------------------------------------------
# Host-side parameter plumbing
# -----------------------------------------------------------------------------
def _init_linear(key, fan_in, fan_out):
    """PyTorch nn.Linear default init: U(-1/sqrt(fan_in), 1/sqrt(fan_in)).
    Stored transposed: (in_features, out_features)."""
    kw, kb = jax.random.split(key)
    bound = 1.0 / math.sqrt(fan_in)
    w = jax.random.uniform(kw, (fan_in, fan_out), jnp.float32, -bound, bound)
    b = jax.random.uniform(kb, (1, fan_out), jnp.float32, -bound, bound)
    return w, b


def _pad_row(v, out_pad):
    return jnp.pad(v.astype(jnp.float32), ((0, 0), (0, out_pad - v.shape[1])))


def _permute_pad_weight(w_t, real_sizes, pad_sizes, out_pad):
    """Reorder weight rows from torch concat order [h_{k-1},...,h_0,x0] to the
    append order [x0,h_0,...,h_{k-1}], zero-padding each segment's rows to its
    lane-padded width and the output columns to `out_pad`."""
    out_real = w_t.shape[1]
    n = len(real_sizes)
    torch_sizes = list(reversed(real_sizes))
    starts = [0]
    for s in torch_sizes[:-1]:
        starts.append(starts[-1] + s)
    pieces = []
    for j in range(n):
        t = n - 1 - j                                # torch index of append seg j
        blk = w_t[starts[t]:starts[t] + real_sizes[j], :]
        blk = jnp.pad(blk, ((0, pad_sizes[j] - real_sizes[j]), (0, 0)))
        pieces.append(blk)
    wp = pieces[0] if n == 1 else jnp.concatenate(pieces, axis=0)
    return jnp.pad(wp, ((0, 0), (0, out_pad - out_real)))


class CTGANGeneratorPallas:
    def __init__(self, embedding_dim, generator_dim, data_dim,
                 tanh_output=False, bn=True, compute_dtype=jnp.bfloat16,
                 batch_tile=None, key=None):
        if key is None:
            key = jax.random.PRNGKey(0)
        self.embedding_dim = int(embedding_dim)
        self.data_dim = int(data_dim)
        self.tanh_output = bool(tanh_output)
        self.bn = bool(bn)
        self.compute_dtype = jnp.dtype(compute_dtype)
        itemsize = self.compute_dtype.itemsize

        # Batch tile for the bn=False grid path (power of two, >= sublane tile).
        if batch_tile is None:
            batch_tile = 1024 if itemsize == 2 else 512
        self.batch_tile = max(_next_pow2(batch_tile), _sublane(self.compute_dtype))

        gdims = [int(g) for g in generator_dim]
        self.n_blocks = len(gdims)

        # Padded segment geometry (append order: [x0, h_0, h_1, ...]).
        real_sizes = [self.embedding_dim] + gdims
        pad_sizes = [_round_up(s, _LANE) for s in real_sizes]
        seg_off = [0]
        for p in pad_sizes:
            seg_off.append(seg_off[-1] + p)
        self.seg_w = tuple(pad_sizes)
        self.seg_off = tuple(seg_off)
        self.total_pad = seg_off[-1]
        self.data_dim_pad = _round_up(self.data_dim, _LANE)

        # ---- reference (torch-layout, transposed (in, out)) parameters -----
        self.torch_blocks = []
        dim = self.embedding_dim
        for item in gdims:
            key, sub = jax.random.split(key)
            w, b = _init_linear(sub, dim, item)
            gamma = jnp.ones((1, item), jnp.float32)   # BN default init
            beta = jnp.zeros((1, item), jnp.float32)
            self.torch_blocks.append((w, b, gamma, beta))
            dim += item
        key, sub = jax.random.split(key)
        self.torch_final_w, self.torch_final_b = _init_linear(sub, dim, data_dim)

        # ---- kernel-layout parameters (row-permuted + lane-padded) ----------
        # NOTE: with compute_dtype=bf16 the activation scratch is re-read as MXU
        # input for every later block, so rounding compounds across blocks —
        # fine for GAN generation; use compute_dtype=float32 if exactness matters.
        # bias/gamma/beta stay f32 (BN math runs in f32).
        self.k_blocks = []
        for k, (w, b, gamma, beta) in enumerate(self.torch_blocks):
            rs, ps = real_sizes[:k + 1], pad_sizes[:k + 1]
            wp = _permute_pad_weight(w, rs, ps,
                                     self.seg_w[k + 1]).astype(self.compute_dtype)
            self.k_blocks.append((wp,
                                  _pad_row(b, self.seg_w[k + 1]),
                                  _pad_row(gamma, self.seg_w[k + 1]),
                                  _pad_row(beta, self.seg_w[k + 1])))
        self.k_final_w = _permute_pad_weight(
            self.torch_final_w, real_sizes, pad_sizes,
            self.data_dim_pad).astype(self.compute_dtype)
        self.k_final_b = _pad_row(self.torch_final_b, self.data_dim_pad)

    def __call__(self, x, controls=None):
        if controls is not None:
            x = jnp.concatenate([x, controls], axis=1)
        B, E = x.shape
        assert B >= 1 and E == self.embedding_dim, (B, E, self.embedding_dim)
        dt = self.compute_dtype
        itemsize = dt.itemsize

        # Bucket padded batch to a power of two (>= sublane tile) so repeated
        # calls with varying B reuse one compiled kernel (no Mosaic recompiles).
        b_pad = max(_next_pow2(B), _sublane(dt))

        # Batch tiling.  bn=True needs whole-batch statistics -> one tile.
        # TODO(synk): two-pass BN statistics (per-tile sum/sumsq accumulated
        # across grid steps) so the bn=True path can also be batch-tiled /
        # megacore-split for very large batches on v7x's 64 MiB VMEM.
        tile = b_pad if self.bn else min(b_pad, self.batch_tile)
        n_tiles = b_pad // tile
        single_tile = (n_tiles == 1)
        prefetch_weights = single_tile          # weights DMA'd once, overlap MXU

        e_pad = self.seg_w[0]
        x_p = jnp.zeros((b_pad, e_pad), dt).at[:B, :E].set(x.astype(dt))

        args = [x_p]
        for (w, b, g, bt) in self.k_blocks:
            args += [w, b, g, bt]
        args += [self.k_final_w, self.k_final_b]

        # memory_space-only specs: no block-pipelining machinery, single buffer.
        vmem_spec = pl.BlockSpec(memory_space=pltpu.MemorySpace.VMEM)
        w_spec = (pl.BlockSpec(memory_space=pl.ANY) if prefetch_weights
                  else vmem_spec)

        in_specs = [vmem_spec if single_tile
                    else pl.BlockSpec((tile, e_pad), lambda i: (i, 0))]
        for _ in range(self.n_blocks):
            in_specs += [w_spec, vmem_spec, vmem_spec, vmem_spec]
        in_specs += [w_spec, vmem_spec]

        if single_tile:
            grid = ()
            out_spec = vmem_spec
            dim_sem = None
        else:
            grid = (n_tiles,)
            out_spec = pl.BlockSpec((tile, self.data_dim_pad), lambda i: (i, 0))
            dim_sem = ("parallel",)            # v7x: both TensorCores split tiles

        scratch = [pltpu.VMEM((tile, self.total_pad), dt)]
        if prefetch_weights:
            for (w, _, _, _) in self.k_blocks:
                scratch.append(pltpu.VMEM(w.shape, dt))
            scratch.append(pltpu.VMEM(self.k_final_w.shape, dt))
            scratch.append(pltpu.SemaphoreType.DMA((self.n_blocks + 1,)))

        # Explicit scoped-VMEM sizing (+50% headroom) instead of 16/32 MiB defaults.
        w_bytes = (sum(int(w.size) for (w, _, _, _) in self.k_blocks)
                   + int(self.k_final_w.size)) * itemsize
        small_bytes = (sum(int(a.size) for (_, b, g, bt) in self.k_blocks
                           for a in (b, g, bt)) + int(self.k_final_b.size)) * 4
        max_w = max(list(self.seg_w[1:]) + [self.data_dim_pad])
        est = (tile * self.total_pad * itemsize            # activation scratch
               + w_bytes + small_bytes
               + (1 if single_tile else 2) * tile * e_pad * itemsize
               + (1 if single_tile else 2) * tile * self.data_dim_pad * 4
               + 4 * tile * max_w * 4)                      # f32 h/hc/epilogue temps
        vmem_limit = min(max(int(est * 1.5) + (2 << 20), 32 << 20), 110 << 20)

        kernel = functools.partial(
            _fused_kernel,
            n_blocks=self.n_blocks, seg_off=self.seg_off, seg_w=self.seg_w,
            bn=self.bn, tanh_output=self.tanh_output,
            tanh_bf16=(itemsize == 2),
            b_real=B, rows_per_tile=tile,
            prefetch_weights=prefetch_weights)

        out = pl.pallas_call(
            kernel,
            out_shape=jax.ShapeDtypeStruct((b_pad, self.data_dim_pad),
                                           jnp.float32),
            grid=grid,
            in_specs=in_specs,
            out_specs=out_spec,
            scratch_shapes=scratch,
            compiler_params=pltpu.CompilerParams(
                dimension_semantics=dim_sem,
                vmem_limit_bytes=vmem_limit),
        )(*args)
        return out[:B, :self.data_dim]


# -----------------------------------------------------------------------------
# Pure-JAX reference (uses the un-permuted, un-padded torch-layout weights).
# -----------------------------------------------------------------------------
def _reference_forward(model, x, controls=None):
    if controls is not None:
        x = jnp.concatenate([x, controls], axis=1)
    x = x.astype(jnp.float32)
    for (w, b, gamma, beta) in model.torch_blocks:
        h = x @ w + b
        if model.bn:
            mean = jnp.mean(h, axis=0, keepdims=True)
            var = jnp.mean((h - mean) ** 2, axis=0, keepdims=True)
            h = (h - mean) / jnp.sqrt(var + _BN_EPS) * gamma + beta
        h = jnp.maximum(h, 0.0)
        x = jnp.concatenate([h, x], axis=1)
    out = x @ model.torch_final_w + model.torch_final_b
    if model.tanh_output:
        out = jnp.tanh(out)
    return out


# -----------------------------------------------------------------------------
if __name__ == "__main__":
    key = jax.random.PRNGKey(0)
    k1, k2, k3, kx, kx2, kc = jax.random.split(key, 6)

    # Config 1: BN + Tanh, f32 compute, batch NOT a multiple of the sublane tile
    # (exercises padded-row masking + single-tile weight DMA prefetch).
    batch, emb = 6, 32
    model = CTGANGeneratorPallas(emb, (32, 64), 48, tanh_output=True, bn=True,
                                 compute_dtype=jnp.float32, key=k1)
    x = jax.random.normal(kx, (batch, emb), jnp.float32)
    out = jax.block_until_ready(model(x))
    ref = _reference_forward(model, x)
    assert out.shape == (batch, 48), out.shape
    assert jnp.allclose(out, ref, atol=1e-4, rtol=1e-4), (
        float(jnp.max(jnp.abs(out - ref))))

    # Config 2: no BN, no Tanh (bias path), f32, batch tiled over a grid
    # (batch_tile=8, B=20 -> b_pad=32, grid=(4,), "parallel" semantics).
    model2 = CTGANGeneratorPallas(emb, (32,), 16, tanh_output=False, bn=False,
                                  compute_dtype=jnp.float32, batch_tile=8,
                                  key=k2)
    x2 = jax.random.normal(kx2, (20, emb), jnp.float32)
    out2 = jax.block_until_ready(model2(x2))
    ref2 = _reference_forward(model2, x2)
    assert out2.shape == (20, 16), out2.shape
    assert jnp.allclose(out2, ref2, atol=1e-4, rtol=1e-4), (
        float(jnp.max(jnp.abs(out2 - ref2))))

    # Config 3: default compute dtype (bf16 weights/activations, f32 MXU
    # accumulation + f32 BN stats) with `controls` concatenation.
    model3 = CTGANGeneratorPallas(emb, (32, 32), 16, tanh_output=True, bn=True,
                                  key=k3)
    x3 = jax.random.normal(kx, (batch, emb - 8), jnp.float32)
    ctrl = jax.random.normal(kc, (batch, 8), jnp.float32)
    out3 = jax.block_until_ready(model3(x3, controls=ctrl))
    ref3 = _reference_forward(model3, x3, controls=ctrl)
    assert out3.shape == (batch, 16), out3.shape
    assert bool(jnp.all(jnp.isfinite(out3)))
    assert jnp.allclose(out3, ref3, atol=0.2, rtol=0.2), (
        float(jnp.max(jnp.abs(out3 - ref3))))

    print("KERNEL_OK")
</pallas_src>

<mosaic_0001>
module attributes {stable_mosaic.version = 11 : i64} {
  func.func @_fused_kernel(%arg0: memref<8x128xf32, #tpu.memory_space<vmem>>, %arg1: memref<128x128xf32, #tpu.memory_space<any>>, %arg2: memref<1x128xf32, #tpu.memory_space<vmem>>, %arg3: memref<1x128xf32, #tpu.memory_space<vmem>>, %arg4: memref<1x128xf32, #tpu.memory_space<vmem>>, %arg5: memref<256x128xf32, #tpu.memory_space<any>>, %arg6: memref<1x128xf32, #tpu.memory_space<vmem>>, %arg7: memref<1x128xf32, #tpu.memory_space<vmem>>, %arg8: memref<1x128xf32, #tpu.memory_space<vmem>>, %arg9: memref<384x128xf32, #tpu.memory_space<any>>, %arg10: memref<1x128xf32, #tpu.memory_space<vmem>>, %arg11: memref<8x128xf32, #tpu.memory_space<vmem>>, %arg12: memref<8x384xf32, #tpu.memory_space<vmem>>, %arg13: memref<128x128xf32, #tpu.memory_space<vmem>>, %arg14: memref<256x128xf32, #tpu.memory_space<vmem>>, %arg15: memref<384x128xf32, #tpu.memory_space<vmem>>, %arg16: memref<3x!tpu.dma_semaphore, #tpu.memory_space<semaphore_mem>>) attributes {dimension_semantics = [], scalar_prefetch = 0 : i64, scratch_operands = 5 : i64, tpu.core_type = #tpu.core_type<tc>} {
    %c0_i32 = arith.constant 0 : i32
    %0 = tpu.memref_slice %arg16[%c0_i32] : memref<3x!tpu.dma_semaphore, #tpu.memory_space<semaphore_mem>> -> memref<1x!tpu.dma_semaphore, #tpu.memory_space<semaphore_mem>>
    %1 = tpu.memref_squeeze %0 : memref<1x!tpu.dma_semaphore, #tpu.memory_space<semaphore_mem>> -> memref<!tpu.dma_semaphore, #tpu.memory_space<semaphore_mem>>
    tpu.enqueue_dma source(%arg1 : memref<128x128xf32, #tpu.memory_space<any>>) target(%arg13 : memref<128x128xf32, #tpu.memory_space<vmem>>) target_semaphore(%1 : memref<!tpu.dma_semaphore, #tpu.memory_space<semaphore_mem>>)
    %c1_i32 = arith.constant 1 : i32
    %2 = tpu.memref_slice %arg16[%c1_i32] : memref<3x!tpu.dma_semaphore, #tpu.memory_space<semaphore_mem>> -> memref<1x!tpu.dma_semaphore, #tpu.memory_space<semaphore_mem>>
    %3 = tpu.memref_squeeze %2 : memref<1x!tpu.dma_semaphore, #tpu.memory_space<semaphore_mem>> -> memref<!tpu.dma_semaphore, #tpu.memory_space<semaphore_mem>>
    tpu.enqueue_dma source(%arg5 : memref<256x128xf32, #tpu.memory_space<any>>) target(%arg14 : memref<256x128xf32, #tpu.memory_space<vmem>>) target_semaphore(%3 : memref<!tpu.dma_semaphore, #tpu.memory_space<semaphore_mem>>)
    %c2_i32 = arith.constant 2 : i32
    %4 = tpu.memref_slice %arg16[%c2_i32] : memref<3x!tpu.dma_semaphore, #tpu.memory_space<semaphore_mem>> -> memref<1x!tpu.dma_semaphore, #tpu.memory_space<semaphore_mem>>
    %5 = tpu.memref_squeeze %4 : memref<1x!tpu.dma_semaphore, #tpu.memory_space<semaphore_mem>> -> memref<!tpu.dma_semaphore, #tpu.memory_space<semaphore_mem>>
    tpu.enqueue_dma source(%arg9 : memref<384x128xf32, #tpu.memory_space<any>>) target(%arg15 : memref<384x128xf32, #tpu.memory_space<vmem>>) target_semaphore(%5 : memref<!tpu.dma_semaphore, #tpu.memory_space<semaphore_mem>>)
    %6 = tpu.iota {dimensions = array<i32: 0>} : vector<8x1xi32>
    %c6_i32 = arith.constant 6 : i32
    %7 = vector.broadcast %c6_i32 : i32 to vector<8x1xi32>
    %8 = arith.cmpi slt, %6, %7 : vector<8x1xi32>
    %9 = arith.extui %8 : vector<8x1xi1> to vector<8x1xi32>
    %10 = arith.sitofp %9 : vector<8x1xi32> to vector<8x1xf32>
    %c0 = arith.constant 0 : index
    %c0_0 = arith.constant 0 : index
    %11 = vector.load %arg0[%c0, %c0_0] : memref<8x128xf32, #tpu.memory_space<vmem>>, vector<8x128xf32>
    %c0_1 = arith.constant 0 : index
    %c0_2 = arith.constant 0 : index
    %12 = vector.load %arg12[%c0_1, %c0_2] : memref<8x384xf32, #tpu.memory_space<vmem>>, vector<8x128xf32>
    tpu.vector_store %arg12[%c0_1, %c0_2], %11 {strides = array<i32>} : memref<8x384xf32, #tpu.memory_space<vmem>>, vector<8x128xf32>,
    %c0_3 = arith.constant 0 : index
    %c0_4 = arith.constant 0 : index
    %13 = vector.load %arg12[%c0_3, %c0_4] : memref<8x384xf32, #tpu.memory_space<vmem>>, vector<8x128xf32>
    %c0_i32_5 = arith.constant 0 : i32
    %14 = tpu.memref_slice %arg16[%c0_i32_5] : memref<3x!tpu.dma_semaphore, #tpu.memory_space<semaphore_mem>> -> memref<1x!tpu.dma_semaphore, #tpu.memory_space<semaphore_mem>>
    %15 = tpu.memref_squeeze %14 : memref<1x!tpu.dma_semaphore, #tpu.memory_space<semaphore_mem>> -> memref<!tpu.dma_semaphore, #tpu.memory_space<semaphore_mem>>
    tpu.wait_dma2 semaphore(%15 : memref<!tpu.dma_semaphore, #tpu.memory_space<semaphore_mem>>) src(%arg1 : memref<128x128xf32, #tpu.memory_space<any>>) dst(%arg13 : memref<128x128xf32, #tpu.memory_space<vmem>>)
    %c0_6 = arith.constant 0 : index
    %c0_7 = arith.constant 0 : index
    %16 = vector.load %arg13[%c0_6, %c0_7] : memref<128x128xf32, #tpu.memory_space<vmem>>, vector<128x128xf32>
    %cst = arith.constant dense<0.000000e+00> : vector<8x128xf32>
    %17 = tpu.matmul %13, %16, %cst {dimension_numbers = #tpu.dot_dimension_numbers<[1], [0], [0], [1], [0, 0, 1, 1], [], []>} : vector<8x128xf32>, vector<128x128xf32>, vector<8x128xf32> -> vector<8x128xf32>
    %cst_8 = arith.constant dense<0.000000e+00> : vector<128xf32>
    %18 = vector.multi_reduction <add>, %17, %cst_8 [0] : vector<8x128xf32> to vector<128xf32>
    %19 = vector.shape_cast %18 : vector<128xf32> to vector<1x128xf32>
    %cst_9 = arith.constant 0.166666672 : f32
    %20 = vector.broadcast %cst_9 : f32 to vector<1x128xf32>
    %21 = arith.mulf %19, %20 : vector<1x128xf32>
    %22 = vector.broadcast %21 : vector<1x128xf32> to vector<8x128xf32>
    %23 = arith.subf %17, %22 : vector<8x128xf32>
    %24 = vector.broadcast %10 : vector<8x1xf32> to vector<8x128xf32>
    %25 = arith.mulf %23, %24 : vector<8x128xf32>
    %26 = arith.mulf %25, %25 : vector<8x128xf32>
    %cst_10 = arith.constant dense<0.000000e+00> : vector<128xf32>
    %27 = vector.multi_reduction <add>, %26, %cst_10 [0] : vector<8x128xf32> to vector<128xf32>
    %28 = vector.shape_cast %27 : vector<128xf32> to vector<1x128xf32>
    %cst_11 = arith.constant 0.166666672 : f32
    %29 = vector.broadcast %cst_11 : f32 to vector<1x128xf32>
    %30 = arith.mulf %28, %29 : vector<1x128xf32>
    %c0_12 = arith.constant 0 : index
    %c0_13 = arith.constant 0 : index
    %31 = vector.load %arg3[%c0_12, %c0_13] : memref<1x128xf32, #tpu.memory_space<vmem>>, vector<1x128xf32>
    %cst_14 = arith.constant 9.99999974E-6 : f32
    %32 = vector.broadcast %cst_14 : f32 to vector<1x128xf32>
    %33 = arith.addf %30, %32 : vector<1x128xf32>
    %34 = math.rsqrt %33 : vector<1x128xf32>
    %35 = arith.mulf %31, %34 : vector<1x128xf32>
    %36 = vector.broadcast %35 : vector<1x128xf32> to vector<8x128xf32>
    %37 = arith.mulf %25, %36 : vector<8x128xf32>
    %c0_15 = arith.constant 0 : index
    %c0_16 = arith.constant 0 : index
    %38 = vector.load %arg4[%c0_15, %c0_16] : memref<1x128xf32, #tpu.memory_space<vmem>>, vector<1x128xf32>
    %39 = vector.broadcast %38 : vector<1x128xf32> to vector<8x128xf32>
    %40 = arith.addf %37, %39 : vector<8x128xf32>
    %cst_17 = arith.constant 0.000000e+00 : f32
    %41 = vector.broadcast %cst_17 : f32 to vector<8x128xf32>
    %42 = arith.cmpf ogt, %40, %41 : vector<8x128xf32>
    %43 = vector.broadcast %8 : vector<8x1xi1> to vector<8x128xi1>
    %44 = arith.andi %42, %43 : vector<8x128xi1>
    %cst_18 = arith.constant 0.000000e+00 : f32
    %45 = vector.broadcast %cst_18 : f32 to vector<8x128xf32>
    %46 = arith.select %44, %40, %45 : vector<8x128xi1>, vector<8x128xf32>
    %c0_19 = arith.constant 0 : index
    %c128 = arith.constant 128 : index
    %47 = vector.load %arg12[%c0_19, %c128] : memref<8x384xf32, #tpu.memory_space<vmem>>, vector<8x128xf32>
    tpu.vector_store %arg12[%c0_19, %c128], %46 {strides = array<i32>} : memref<8x384xf32, #tpu.memory_space<vmem>>, vector<8x128xf32>,
    %c0_20 = arith.constant 0 : index
    %c0_21 = arith.constant 0 : index
    %48 = vector.load %arg12[%c0_20, %c0_21] : memref<8x384xf32, #tpu.memory_space<vmem>>, vector<8x256xf32>
    %c1_i32_22 = arith.constant 1 : i32
    %49 = tpu.memref_slice %arg16[%c1_i32_22] : memref<3x!tpu.dma_semaphore, #tpu.memory_space<semaphore_mem>> -> memref<1x!tpu.dma_semaphore, #tpu.memory_space<semaphore_mem>>
    %50 = tpu.memref_squeeze %49 : memref<1x!tpu.dma_semaphore, #tpu.memory_space<semaphore_mem>> -> memref<!tpu.dma_semaphore, #tpu.memory_space<semaphore_mem>>
    tpu.wait_dma2 semaphore(%50 : memref<!tpu.dma_semaphore, #tpu.memory_space<semaphore_mem>>) src(%arg5 : memref<256x128xf32, #tpu.memory_space<any>>) dst(%arg14 : memref<256x128xf32, #tpu.memory_space<vmem>>)
    %c0_23 = arith.constant 0 : index
    %c0_24 = arith.constant 0 : index
    %51 = vector.load %arg14[%c0_23, %c0_24] : memref<256x128xf32, #tpu.memory_space<vmem>>, vector<256x128xf32>
    %cst_25 = arith.constant dense<0.000000e+00> : vector<8x128xf32>
    %52 = tpu.matmul %48, %51, %cst_25 {dimension_numbers = #tpu.dot_dimension_numbers<[1], [0], [0], [1], [0, 0, 1, 1], [], []>} : vector<8x256xf32>, vector<256x128xf32>, vector<8x128xf32> -> vector<8x128xf32>
    %cst_26 = arith.constant dense<0.000000e+00> : vector<128xf32>
    %53 = vector.multi_reduction <add>, %52, %cst_26 [0] : vector<8x128xf32> to vector<128xf32>
    %54 = vector.shape_cast %53 : vector<128xf32> to vector<1x128xf32>
    %cst_27 = arith.constant 0.166666672 : f32
    %55 = vector.broadcast %cst_27 : f32 to vector<1x128xf32>
    %56 = arith.mulf %54, %55 : vector<1x128xf32>
    %57 = vector.broadcast %56 : vector<1x128xf32> to vector<8x128xf32>
    %58 = arith.subf %52, %57 : vector<8x128xf32>
    %59 = vector.broadcast %10 : vector<8x1xf32> to vector<8x128xf32>
    %60 = arith.mulf %58, %59 : vector<8x128xf32>
    %61 = arith.mulf %60, %60 : vector<8x128xf32>
    %cst_28 = arith.constant dense<0.000000e+00> : vector<128xf32>
    %62 = vector.multi_reduction <add>, %61, %cst_28 [0] : vector<8x128xf32> to vector<128xf32>
    %63 = vector.shape_cast %62 : vector<128xf32> to vector<1x128xf32>
    %cst_29 = arith.constant 0.166666672 : f32
    %64 = vector.broadcast %cst_29 : f32 to vector<1x128xf32>
    %65 = arith.mulf %63, %64 : vector<1x128xf32>
    %c0_30 = arith.constant 0 : index
    %c0_31 = arith.constant 0 : index
    %66 = vector.load %arg7[%c0_30, %c0_31] : memref<1x128xf32, #tpu.memory_space<vmem>>, vector<1x128xf32>
    %cst_32 = arith.constant 9.99999974E-6 : f32
    %67 = vector.broadcast %cst_32 : f32 to vector<1x128xf32>
    %68 = arith.addf %65, %67 : vector<1x128xf32>
    %69 = math.rsqrt %68 : vector<1x128xf32>
    %70 = arith.mulf %66, %69 : vector<1x128xf32>
    %71 = vector.broadcast %70 : vector<1x128xf32> to vector<8x128xf32>
    %72 = arith.mulf %60, %71 : vector<8x128xf32>
    %c0_33 = arith.constant 0 : index
    %c0_34 = arith.constant 0 : index
    %73 = vector.load %arg8[%c0_33, %c0_34] : memref<1x128xf32, #tpu.memory_space<vmem>>, vector<1x128xf32>
    %74 = vector.broadcast %73 : vector<1x128xf32> to vector<8x128xf32>
    %75 = arith.addf %72, %74 : vector<8x128xf32>
    %cst_35 = arith.constant 0.000000e+00 : f32
    %76 = vector.broadcast %cst_35 : f32 to vector<8x128xf32>
    %77 = arith.cmpf ogt, %75, %76 : vector<8x128xf32>
    %78 = vector.broadcast %8 : vector<8x1xi1> to vector<8x128xi1>
    %79 = arith.andi %77, %78 : vector<8x128xi1>
    %cst_36 = arith.constant 0.000000e+00 : f32
    %80 = vector.broadcast %cst_36 : f32 to vector<8x128xf32>
    %81 = arith.select %79, %75, %80 : vector<8x128xi1>, vector<8x128xf32>
    %c0_37 = arith.constant 0 : index
    %c256 = arith.constant 256 : index
    %82 = vector.load %arg12[%c0_37, %c256] : memref<8x384xf32, #tpu.memory_space<vmem>>, vector<8x128xf32>
    tpu.vector_store %arg12[%c0_37, %c256], %81 {strides = array<i32>} : memref<8x384xf32, #tpu.memory_space<vmem>>, vector<8x128xf32>,
    %c0_38 = arith.constant 0 : index
    %c0_39 = arith.constant 0 : index
    %83 = vector.load %arg12[%c0_38, %c0_39] : memref<8x384xf32, #tpu.memory_space<vmem>>, vector<8x384xf32>
    %c2_i32_40 = arith.constant 2 : i32
    %84 = tpu.memref_slice %arg16[%c2_i32_40] : memref<3x!tpu.dma_semaphore, #tpu.memory_space<semaphore_mem>> -> memref<1x!tpu.dma_semaphore, #tpu.memory_space<semaphore_mem>>
    %85 = tpu.memref_squeeze %84 : memref<1x!tpu.dma_semaphore, #tpu.memory_space<semaphore_mem>> -> memref<!tpu.dma_semaphore, #tpu.memory_space<semaphore_mem>>
    tpu.wait_dma2 semaphore(%85 : memref<!tpu.dma_semaphore, #tpu.memory_space<semaphore_mem>>) src(%arg9 : memref<384x128xf32, #tpu.memory_space<any>>) dst(%arg15 : memref<384x128xf32, #tpu.memory_space<vmem>>)
    %c0_41 = arith.constant 0 : index
    %c0_42 = arith.constant 0 : index
    %86 = vector.load %arg15[%c0_41, %c0_42] : memref<384x128xf32, #tpu.memory_space<vmem>>, vector<384x128xf32>
    %cst_43 = arith.constant dense<0.000000e+00> : vector<8x128xf32>
    %87 = tpu.matmul %83, %86, %cst_43 {dimension_numbers = #tpu.dot_dimension_numbers<[1], [0], [0], [1], [0, 0, 1, 1], [], []>} : vector<8x384xf32>, vector<384x128xf32>, vector<8x128xf32> -> vector<8x128xf32>
    %c0_44 = arith.constant 0 : index
    %c0_45 = arith.constant 0 : index
    %88 = vector.load %arg10[%c0_44, %c0_45] : memref<1x128xf32, #tpu.memory_space<vmem>>, vector<1x128xf32>
    %89 = vector.broadcast %88 : vector<1x128xf32> to vector<8x128xf32>
    %90 = arith.addf %87, %89 : vector<8x128xf32>
    %91 = math.tanh %90 : vector<8x128xf32>
    %c0_46 = arith.constant 0 : index
    %c0_47 = arith.constant 0 : index
    %92 = vector.load %arg11[%c0_46, %c0_47] : memref<8x128xf32, #tpu.memory_space<vmem>>, vector<8x128xf32>
    tpu.vector_store %arg11[%c0_46, %c0_47], %91 {strides = array<i32>} : memref<8x128xf32, #tpu.memory_space<vmem>>, vector<8x128xf32>,
    return
  }
}

</mosaic_0001>

<llo_original>
// kernel: tpu_custom_call.1
$region0: #{tpu_custom_call.1}
  #allocation0 [shape = 'u32[]', space=smem, size = 0x4, offset = 0x4, fixed_abs, tag = 'smem constant byte address 0x4 - core index']
  #allocation1 [shape = 'u32[144,128]{1,0:T(1,128)}', space=vmem, size = 0x12000, scoped, tag = 'internal scratch']
  #allocation2 [shape = 'f32[8,384]{1,0:T(8,128)}', space=vmem, size = 0x3000, scoped, tag = 'scratch operand']
  #allocation3 [shape = 'f32[128,128]{1,0:T(8,128)}', space=vmem, size = 0x10000, scoped, tag = 'scratch operand']
  #allocation4 [shape = 'f32[256,128]{1,0:T(8,128)}', space=vmem, size = 0x20000, scoped, tag = 'scratch operand']
  #allocation5 [shape = 'f32[384,128]{1,0:T(8,128)}', space=vmem, size = 0x30000, scoped, tag = 'scratch operand']
  #allocation6 [shape = 's32[3]{0}', space=sflag, size = 0xc, scoped, tag = 'scratch operand']
  #allocation11 [shape = 's32[]', space=sflag, size = 0x4, offset = 0, fixed_abs, tag = 'sflag constant byte address 0x0 - dummy sync flag']
  #allocation12 [shape = 's32[]', space=sflag, size = 0x4, offset = 0, fixed_abs, tag = 'sflag constant byte address 0x0 - dummy sync flag']
  #allocation13 [shape = 'u32[]', space=smem, size = 0x4, offset = 0x44, fixed_abs, tag = 'smem constant byte address 0x44 - assertion arg 0']
  #allocation14 [shape = 'u32[]', space=smem, size = 0x4, offset = 0x48, fixed_abs, tag = 'smem constant byte address 0x48 - assertion arg 1']
  #allocation15 [shape = 's32[]', space=sflag, size = 0x4, offset = 0, fixed_abs, tag = 'sflag constant byte address 0x0 - dummy sync flag']
  #allocation16 [shape = 's32[]', space=sflag, size = 0x4, offset = 0, fixed_abs, tag = 'sflag constant byte address 0x0 - dummy sync flag']
  #allocation17 [shape = 's32[]', space=sflag, size = 0x4, offset = 0, fixed_abs, tag = 'sflag constant byte address 0x0 - dummy sync flag']
  #allocation18 [shape = 's32[]', space=sflag, size = 0x4, offset = 0, fixed_abs, tag = 'sflag constant byte address 0x0 - dummy sync flag']
  %s0 = inlined_call_operand.hbm [shape: f32[8,128], index: 0, kind: input, shape index: {}]
  %s1 = inlined_call_operand.hbm [shape: f32[128,128], index: 1, kind: input, shape index: {}]
  %s2 = inlined_call_operand.vmem [shape: f32[1,128], index: 2, kind: input, shape index: {}]
  %s3 = inlined_call_operand.vmem [shape: f32[1,128], index: 3, kind: input, shape index: {}]
  %s4 = inlined_call_operand.vmem [shape: f32[1,128], index: 4, kind: input, shape index: {}]
  %s5 = inlined_call_operand.hbm [shape: f32[256,128], index: 5, kind: input, shape index: {}]
  %s6 = inlined_call_operand.vmem [shape: f32[1,128], index: 6, kind: input, shape index: {}]
  %s7 = inlined_call_operand.vmem [shape: f32[1,128], index: 7, kind: input, shape index: {}]
  %s8 = inlined_call_operand.vmem [shape: f32[1,128], index: 8, kind: input, shape index: {}]
  %s9 = inlined_call_operand.hbm [shape: f32[384,128], index: 9, kind: input, shape index: {}]
  %s10 = inlined_call_operand.vmem [shape: f32[1,128], index: 10, kind: input, shape index: {}]
  %s11 = inlined_call_operand.hbm [shape: f32[8,128], index: 11, kind: output, shape index: {}]
  %s12 = sld [smem:[#allocation0]]
  $region58: #{tpu_custom_call.1} parent=0
    _
  %s14 = ssub.s32 1, %s12
  %s15 = scalar_select 0, %s14, %s12
  $region1: #{tpu_custom_call.1} parent=0
    #allocation7 [shape = 'u8[4096]{0}', space=vmem, size = 0x1000, scoped, tag = 'input window, operand 0, single buffered']
    #allocation8 [shape = 's32[1]{0}', space=sflag, size = 0x4, scoped, tag = 'scoped memory for tpu_custom_call.1']
    #allocation9 [shape = 's32[1]{0}', space=sflag, size = 0x4, scoped, tag = 'scoped memory for tpu_custom_call.1']
    #allocation10 [shape = 'u8[4096]{0}', space=vmem, size = 0x1000, scoped, tag = 'output window, operand 0, single buffered']
    %16 = vsyncpa [#allocation8], 0
    %17 = vsyncpa [#allocation9], 0
    // Predicated region
    $region2: #{tpu_custom_call.1} parent=1 // pred_check
      _
    $region3: #{tpu_custom_call.1} parent=1 // pred_check_branch
      %19 = sbr.rel (0) target = $region5
    $region4: #{tpu_custom_call.1} parent=1 // pred_region
      %s21 = ssub.s32 128, 128
      %22 = vsyncadd [#allocation8], %s21
      %s24 = sshll.u32 [#allocation7], 4
      %s25 = int_to_ptr.vmem [resolvable:$true] %s24
      %27 = dma.hbm_to_vmem [thread:$0]  %s0, 128, %s25, [#allocation8]
    $region5: #{tpu_custom_call.1} parent=1 // pred_fallthru
      _
    // Predicated region
    $region6: #{tpu_custom_call.1} parent=1 // pred_check
      _
    $region7: #{tpu_custom_call.1} parent=1 // pred_check_branch
      %29 = sbr.rel (0) target = $region9
    $region8: #{tpu_custom_call.1} parent=1 // pred_region
      _
    $region9: #{tpu_custom_call.1} parent=1 // pred_fallthru
      _
    // Predicated region
    $region10: #{tpu_custom_call.1} parent=1 // pred_check
      _
    $region11: #{tpu_custom_call.1} parent=1 // pred_check_branch
      %31 = sbr.rel (0) target = $region13
    $region12: #{tpu_custom_call.1} parent=1 // pred_region
      _
    $region13: #{tpu_custom_call.1} parent=1 // pred_fallthru
      _
    // Predicated region
    $region14: #{tpu_custom_call.1} parent=1 // pred_check
      _
    $region15: #{tpu_custom_call.1} parent=1 // pred_check_branch
      %33 = sbr.rel (0) target = $region17
    $region16: #{tpu_custom_call.1} parent=1 // pred_region
      _
    $region17: #{tpu_custom_call.1} parent=1 // pred_fallthru
      _
    // Predicated region
    $region18: #{tpu_custom_call.1} parent=1 // pred_check
      _
    $region19: #{tpu_custom_call.1} parent=1 // pred_check_branch
      %35 = sbr.rel (0) target = $region21
    $region20: #{tpu_custom_call.1} parent=1 // pred_region
      _
    $region21: #{tpu_custom_call.1} parent=1 // pred_fallthru
      _
    // Predicated region
    $region22: #{tpu_custom_call.1} parent=1 // pred_check
      _
    $region23: #{tpu_custom_call.1} parent=1 // pred_check_branch
      %37 = sbr.rel (0) target = $region25
    $region24: #{tpu_custom_call.1} parent=1 // pred_region
      _
    $region25: #{tpu_custom_call.1} parent=1 // pred_fallthru
      _
    // Predicated region
    $region26: #{tpu_custom_call.1} parent=1 // pred_check
      _
    $region27: #{tpu_custom_call.1} parent=1 // pred_check_branch
      %39 = sbr.rel (0) target = $region29
    $region28: #{tpu_custom_call.1} parent=1 // pred_region
      _
    $region29: #{tpu_custom_call.1} parent=1 // pred_fallthru
      _
    // Predicated region
    $region30: #{tpu_custom_call.1} parent=1 // pred_check
      _
    $region31: #{tpu_custom_call.1} parent=1 // pred_check_branch
      %41 = sbr.rel (0) target = $region33
    $region32: #{tpu_custom_call.1} parent=1 // pred_region
      _
    $region33: #{tpu_custom_call.1} parent=1 // pred_fallthru
      _
    // Predicated region
    $region34: #{tpu_custom_call.1} parent=1 // pred_check
      _
    $region35: #{tpu_custom_call.1} parent=1 // pred_check_branch
      %43 = sbr.rel (0) target = $region37
    $region36: #{tpu_custom_call.1} parent=1 // pred_region
      %44 = dma.done [#allocation8], 128
    $region37: #{tpu_custom_call.1} parent=1 // pred_fallthru
      _
    // Predicated region
    $region38: #{tpu_custom_call.1} parent=1 // pred_check
      _
    $region39: #{tpu_custom_call.1} parent=1 // pred_check_branch
      %46 = sbr.rel target = $region41
    $region40: #{tpu_custom_call.1} parent=1 // pred_region
      %47 = sst [smem:[#allocation13]] [#allocation12]
      %48 = sst [smem:[#allocation14]] [#allocation11]
    $region41: #{tpu_custom_call.1} parent=1 // pred_fallthru
      _
    %50 = shalt.err (0)
    %s52 = sshll.u32 [#allocation3], 4
    %s53 = int_to_ptr.vmem [resolvable:$true] %s52
    %55 = dma.hbm_to_vmem [thread:$0]  %s1, 2048, %s53, [#allocation6]
    %s56 = scalar_lea.sflag [#allocation6], 1
    // Predicated region
    $region42: #{tpu_custom_call.1} parent=1 // pred_check
      _
    $region43: #{tpu_custom_call.1} parent=1 // pred_check_branch
      %58 = sbr.rel target = $region45
    $region44: #{tpu_custom_call.1} parent=1 // pred_region
      %59 = sst [smem:[#allocation13]] [#allocation16]
      %60 = sst [smem:[#allocation14]] [#allocation15]
    $region45: #{tpu_custom_call.1} parent=1 // pred_fallthru
      _
    %62 = shalt.err (0)
    %s64 = sshll.u32 [#allocation4], 4
    %s65 = int_to_ptr.vmem [resolvable:$true] %s64
    %67 = dma.hbm_to_vmem [thread:$0]  %s5, 4096, %s65, %s56
    %s68 = scalar_lea.sflag [#allocation6], 2
    // Predicated region
    $region46: #{tpu_custom_call.1} parent=1 // pred_check
      _
    $region47: #{tpu_custom_call.1} parent=1 // pred_check_branch
      %70 = sbr.rel target = $region49
    $region48: #{tpu_custom_call.1} parent=1 // pred_region
      %71 = sst [smem:[#allocation13]] [#allocation18]
      %72 = sst [smem:[#allocation14]] [#allocation17]
    $region49: #{tpu_custom_call.1} parent=1 // pred_fallthru
      _
    %74 = shalt.err (0)
    %s76 = sshll.u32 [#allocation5], 4
    %s77 = int_to_ptr.vmem [resolvable:$true] %s76
    %79 = dma.hbm_to_vmem [thread:$0]  %s9, 6144, %s77, %s68
    %v80 = vlaneseq
    %v81 = vshrl.u32 %v80, 7
    %vm82 = vcmp.lt.s32.totalorder %v81, 6
    %v83 = vsel %vm82, 1, 0
    %v84 = vcvt.s32.f32 %v83
    %v85 = vld [vmem:[#allocation7] sm:$0xff]
    %86 = vst [vmem:[#allocation2] sm:$0xff] %v85
    %v87 = vld [vmem:[#allocation2] sm:$0xff]
    %s88 = smul.u32 128, 1
    %s89 = sshll.u32 %s88, 4
    %90 = dma.done [#allocation6], %s89
    %v91 = vld [vmem:[#allocation3] sm:$0xff]
    %v92 = vld [vmem:[#allocation3 + $0x8] sm:$0xff]
    %v93 = vld [vmem:[#allocation3 + $0x10] sm:$0xff]
    %v94 = vld [vmem:[#allocation3 + $0x18] sm:$0xff]
    %v95 = vld [vmem:[#allocation3 + $0x20] sm:$0xff]
    %v96 = vld [vmem:[#allocation3 + $0x28] sm:$0xff]
    %v97 = vld [vmem:[#allocation3 + $0x30] sm:$0xff]
    %v98 = vld [vmem:[#allocation3 + $0x38] sm:$0xff]
    %v99 = vld [vmem:[#allocation3 + $0x40] sm:$0xff]
    %v100 = vld [vmem:[#allocation3 + $0x48] sm:$0xff]
    %v101 = vld [vmem:[#allocation3 + $0x50] sm:$0xff]
    %v102 = vld [vmem:[#allocation3 + $0x58] sm:$0xff]
    %v103 = vld [vmem:[#allocation3 + $0x60] sm:$0xff]
    %v104 = vld [vmem:[#allocation3 + $0x68] sm:$0xff]
    %v105 = vld [vmem:[#allocation3 + $0x70] sm:$0xff]
    %v106 = vld [vmem:[#allocation3 + $0x78] sm:$0xff]
    %107 = vmatprep.subr.mxu0 0.0
    %108 = vmatpush1.msra.mxu0 %v106
    %109 = vmatprep.subr.mxu0 0.0
    %110 = vmatpush1.msra.mxu0 %v105
    %111 = vmatprep.subr.mxu0 0.0
    %112 = vmatpush1.msra.mxu0 %v104
    %113 = vmatprep.subr.mxu0 0.0
    %114 = vmatpush1.msra.mxu0 %v103
    %115 = vmatprep.subr.mxu0 0.0
    %116 = vmatpush1.msra.mxu0 %v102
    %117 = vmatprep.subr.mxu0 0.0
    %118 = vmatpush1.msra.mxu0 %v101
    %119 = vmatprep.subr.mxu0 0.0
    %120 = vmatpush1.msra.mxu0 %v100
    %121 = vmatprep.subr.mxu0 0.0
    %122 = vmatpush1.msra.mxu0 %v99
    %123 = vmatprep.subr.mxu0 0.0
    %124 = vmatpush1.msra.mxu0 %v98
    %125 = vmatprep.subr.mxu0 0.0
    %126 = vmatpush1.msra.mxu0 %v97
    %127 = vmatprep.subr.mxu0 0.0
    %128 = vmatpush1.msra.mxu0 %v96
    %129 = vmatprep.subr.mxu0 0.0
    %130 = vmatpush1.msra.mxu0 %v95
    %131 = vmatprep.subr.mxu0 0.0
    %132 = vmatpush1.msra.mxu0 %v94
    %133 = vmatprep.subr.mxu0 0.0
    %134 = vmatpush1.msra.mxu0 %v93
    %135 = vmatprep.subr.mxu0 0.0
    %136 = vmatpush1.msra.mxu0 %v92
    %137 = vmatprep.subr.mxu0 0.0
    %138 = vmatpush1.msra.mxu0 %v91
    %139 = vmatprep.subr.mxu0 0.0
    %140 = vmatpush2.msra.mxu0 0.0
    %141 = vmatprep.subr.mxu0 0.0
    %142 = vmatpush2.msra.mxu0 0.0
    %143 = vmatprep.subr.mxu0 0.0
    %144 = vmatpush2.msra.mxu0 0.0
    %145 = vmatprep.subr.mxu0 0.0
    %146 = vmatpush2.msra.mxu0 0.0
    %147 = vmatprep.subr.mxu0 0.0
    %148 = vmatpush2.msra.mxu0 0.0
    %149 = vmatprep.subr.mxu0 0.0
    %150 = vmatpush2.msra.mxu0 0.0
    %151 = vmatprep.subr.mxu0 0.0
    %152 = vmatpush2.msra.mxu0 0.0
    %153 = vmatprep.subr.mxu0 0.0
    %154 = vmatpush2.msra.mxu0 0.0
    %155 = vmatprep.subr.mxu0 0.0
    %156 = vmatpush2.msra.mxu0 0.0
    %157 = vmatprep.subr.mxu0 0.0
    %158 = vmatpush2.msra.mxu0 0.0
    %159 = vmatprep.subr.mxu0 0.0
    %160 = vmatpush2.msra.mxu0 0.0
    %161 = vmatprep.subr.mxu0 0.0
    %162 = vmatpush2.msra.mxu0 0.0
    %163 = vmatprep.subr.mxu0 0.0
    %164 = vmatpush2.msra.mxu0 0.0
    %165 = vmatprep.subr.mxu0 0.0
    %166 = vmatpush2.msra.mxu0 0.0
    %167 = vmatprep.subr.mxu0 0.0
    %168 = vmatpush2.msra.mxu0 0.0
    %169 = vmatprep.subr.mxu0 0.0
    %170 = vmatpush2.msra.mxu0 0.0
    %171 = vmatprep.mubr.f32.mxu0 0.0
    %172 = vmatmul.mubr.f32.gmra.mxu0 %v87
    %v173 = vpop.f32.mrf.mxu0
    %v174 = vadd.f32 0.0, %v173
    %v175 = vpop.f32.mrf.mxu0
    %176 = vdwg.mxu0
    %v177 = vrot.slane %v174, 4
    %v178 = vadd.f32 %v174, %v177
    %v179 = vrot.slane %v178, 2
    %v180 = vadd.f32 %v178, %v179
    %v181 = vrot.slane %v180, 1
    %v182 = vadd.f32 %v180, %v181
    %v183 = vmul.f32 %v182, 0.16666667
    %v184 = vsub.f32 %v174, %v183
    %v185 = vmul.f32 %v184, %v84
    %v186 = vmul.f32 %v185, %v185
    %v187 = vrot.slane %v186, 4
    %v188 = vadd.f32 %v186, %v187
    %v189 = vrot.slane %v188, 2
    %v190 = vadd.f32 %v188, %v189
    %v191 = vrot.slane %v190, 1
    %v192 = vadd.f32 %v190, %v191
    %v193 = vmul.f32 %v192, 0.16666667
    %v194 = vld [vmem:[%s3] sm:$0x1]
    %v195 = vadd.f32 %v193, 1e-05
    %v196 = vrsqrt.pop %v195
    %v197 = vmul.f32 %v194, %v196
    %v199 = vlaneseq
    %v200 = vshrl.u32 %v199, 7
    %v201 = vsub.s32 0, %v200
    %v202 = vrot.slane %v197, %v201
    %v204 = vmul.f32 %v185, %v202
    %v205 = vld [vmem:[%s4] sm:$0x1]
    %v207 = vlaneseq
    %v208 = vshrl.u32 %v207, 7
    %v209 = vsub.s32 0, %v208
    %v210 = vrot.slane %v205, %v209
    %v212 = vadd.f32 %v204, %v210
    %vm213 = vcmp.gt.f32.partialorder %v212, 0.0
    %vm214 = vcmp.eq.s32.totalorder %v83, 1
    %vm215 = vmand %vm213, %vm214
    %v216 = vsel %vm215, %v212, 0.0
    %217 = vst [vmem:[#allocation2 + $0x8] sm:$0xff] %v216
    %v218 = vld [vmem:[#allocation2] sm:$0xff]
    %v219 = vld [vmem:[#allocation2 + $0x8] sm:$0xff]
    %s220 = smul.u32 256, 1
    %s221 = sshll.u32 %s220, 4
    %222 = dma.done %s56, %s221
    %v223 = vld [vmem:[#allocation4] sm:$0xff]
    %v224 = vld [vmem:[#allocation4 + $0x8] sm:$0xff]
    %v225 = vld [vmem:[#allocation4 + $0x10] sm:$0xff]
    %v226 = vld [vmem:[#allocation4 + $0x18] sm:$0xff]
    %v227 = vld [vmem:[#allocation4 + $0x20] sm:$0xff]
    %v228 = vld [vmem:[#allocation4 + $0x28] sm:$0xff]
    %v229 = vld [vmem:[#allocation4 + $0x30] sm:$0xff]
    %v230 = vld [vmem:[#allocation4 + $0x38] sm:$0xff]
    %v231 = vld [vmem:[#allocation4 + $0x40] sm:$0xff]
    %v232 = vld [vmem:[#allocation4 + $0x48] sm:$0xff]
    %v233 = vld [vmem:[#allocation4 + $0x50] sm:$0xff]
    %v234 = vld [vmem:[#allocation4 + $0x58] sm:$0xff]
    %v235 = vld [vmem:[#allocation4 + $0x60] sm:$0xff]
    %v236 = vld [vmem:[#allocation4 + $0x68] sm:$0xff]
    %v237 = vld [vmem:[#allocation4 + $0x70] sm:$0xff]
    %v238 = vld [vmem:[#allocation4 + $0x78] sm:$0xff]
    %v239 = vld [vmem:[#allocation4 + $0x80] sm:$0xff]
    %v240 = vld [vmem:[#allocation4 + $0x88] sm:$0xff]
    %v241 = vld [vmem:[#allocation4 + $0x90] sm:$0xff]
    %v242 = vld [vmem:[#allocation4 + $0x98] sm:$0xff]
    %v243 = vld [vmem:[#allocation4 + $0xa0] sm:$0xff]
    %v244 = vld [vmem:[#allocation4 + $0xa8] sm:$0xff]
    %v245 = vld [vmem:[#allocation4 + $0xb0] sm:$0xff]
    %v246 = vld [vmem:[#allocation4 + $0xb8] sm:$0xff]
    %v247 = vld [vmem:[#allocation4 + $0xc0] sm:$0xff]
    %v248 = vld [vmem:[#allocation4 + $0xc8] sm:$0xff]
    %v249 = vld [vmem:[#allocation4 + $0xd0] sm:$0xff]
    %v250 = vld [vmem:[#allocation4 + $0xd8] sm:$0xff]
    %v251 = vld [vmem:[#allocation4 + $0xe0] sm:$0xff]
    %v252 = vld [vmem:[#allocation4 + $0xe8] sm:$0xff]
    %v253 = vld [vmem:[#allocation4 + $0xf0] sm:$0xff]
    %v254 = vld [vmem:[#allocation4 + $0xf8] sm:$0xff]
    %255 = vmatprep.subr.mxu0 0.0
    %256 = vmatpush1.msra.mxu0 %v238
    %257 = vmatprep.subr.mxu0 0.0
    %258 = vmatpush1.msra.mxu0 %v237
    %259 = vmatprep.subr.mxu0 0.0
    %260 = vmatpush1.msra.mxu0 %v236
    %261 = vmatprep.subr.mxu0 0.0
    %262 = vmatpush1.msra.mxu0 %v235
    %263 = vmatprep.subr.mxu0 0.0
    %264 = vmatpush1.msra.mxu0 %v234
    %265 = vmatprep.subr.mxu0 0.0
    %266 = vmatpush1.msra.mxu0 %v233
    %267 = vmatprep.subr.mxu0 0.0
    %268 = vmatpush1.msra.mxu0 %v232
    %269 = vmatprep.subr.mxu0 0.0
    %270 = vmatpush1.msra.mxu0 %v231
    %271 = vmatprep.subr.mxu0 0.0
    %272 = vmatpush1.msra.mxu0 %v230
    %273 = vmatprep.subr.mxu0 0.0
    %274 = vmatpush1.msra.mxu0 %v229
    %275 = vmatprep.subr.mxu0 0.0
    %276 = vmatpush1.msra.mxu0 %v228
    %277 = vmatprep.subr.mxu0 0.0
    %278 = vmatpush1.msra.mxu0 %v227
    %279 = vmatprep.subr.mxu0 0.0
    %280 = vmatpush1.msra.mxu0 %v226
    %281 = vmatprep.subr.mxu0 0.0
    %282 = vmatpush1.msra.mxu0 %v225
    %283 = vmatprep.subr.mxu0 0.0
    %284 = vmatpush1.msra.mxu0 %v224
    %285 = vmatprep.subr.mxu0 0.0
    %286 = vmatpush1.msra.mxu0 %v223
    %287 = vmatprep.subr.mxu0 0.0
    %288 = vmatpush2.msra.mxu0 %v254
    %289 = vmatprep.subr.mxu0 0.0
    %290 = vmatpush2.msra.mxu0 %v253
    %291 = vmatprep.subr.mxu0 0.0
    %292 = vmatpush2.msra.mxu0 %v252
    %293 = vmatprep.subr.mxu0 0.0
    %294 = vmatpush2.msra.mxu0 %v251
    %295 = vmatprep.subr.mxu0 0.0
    %296 = vmatpush2.msra.mxu0 %v250
    %297 = vmatprep.subr.mxu0 0.0
    %298 = vmatpush2.msra.mxu0 %v249
    %299 = vmatprep.subr.mxu0 0.0
    %300 = vmatpush2.msra.mxu0 %v248
    %301 = vmatprep.subr.mxu0 0.0
    %302 = vmatpush2.msra.mxu0 %v247
    %303 = vmatprep.subr.mxu0 0.0
    %304 = vmatpush2.msra.mxu0 %v246
    %305 = vmatprep.subr.mxu0 0.0
    %306 = vmatpush2.msra.mxu0 %v245
    %307 = vmatprep.subr.mxu0 0.0
    %308 = vmatpush2.msra.mxu0 %v244
    %309 = vmatprep.subr.mxu0 0.0
    %310 = vmatpush2.msra.mxu0 %v243
    %311 = vmatprep.subr.mxu0 0.0
    %312 = vmatpush2.msra.mxu0 %v242
    %313 = vmatprep.subr.mxu0 0.0
    %314 = vmatpush2.msra.mxu0 %v241
    %315 = vmatprep.subr.mxu0 0.0
    %316 = vmatpush2.msra.mxu0 %v240
    %317 = vmatprep.subr.mxu0 0.0
    %318 = vmatpush2.msra.mxu0 %v239
    %319 = vmatprep.mubr.f32.mxu0 %v219
    %320 = vmatmul.mubr.f32.gmra.mxu0 %v218
    %v321 = vpop.f32.mrf.mxu0
    %v322 = vadd.f32 0.0, %v321
    %v323 = vpop.f32.mrf.mxu0
    %324 = vdwg.mxu0
    %v325 = vrot.slane %v322, 4
    %v326 = vadd.f32 %v322, %v325
    %v327 = vrot.slane %v326, 2
    %v328 = vadd.f32 %v326, %v327
    %v329 = vrot.slane %v328, 1
    %v330 = vadd.f32 %v328, %v329
    %v331 = vmul.f32 %v330, 0.16666667
    %v332 = vsub.f32 %v322, %v331
    %v333 = vmul.f32 %v332, %v84
    %v334 = vmul.f32 %v333, %v333
    %v335 = vrot.slane %v334, 4
    %v336 = vadd.f32 %v334, %v335
    %v337 = vrot.slane %v336, 2
    %v338 = vadd.f32 %v336, %v337
    %v339 = vrot.slane %v338, 1
    %v340 = vadd.f32 %v338, %v339
    %v341 = vmul.f32 %v340, 0.16666667
    %v342 = vld [vmem:[%s7] sm:$0x1]
    %v343 = vadd.f32 %v341, 1e-05
    %v344 = vrsqrt.pop %v343
    %v345 = vmul.f32 %v342, %v344
    %v347 = vlaneseq
    %v348 = vshrl.u32 %v347, 7
    %v349 = vsub.s32 0, %v348
    %v350 = vrot.slane %v345, %v349
    %v352 = vmul.f32 %v333, %v350
    %v353 = vld [vmem:[%s8] sm:$0x1]
    %v355 = vlaneseq
    %v356 = vshrl.u32 %v355, 7
    %v357 = vsub.s32 0, %v356
    %v358 = vrot.slane %v353, %v357
    %v360 = vadd.f32 %v352, %v358
    %vm361 = vcmp.gt.f32.partialorder %v360, 0.0
    %vm362 = vmand %vm361, %vm214
    %v363 = vsel %vm362, %v360, 0.0
    %364 = vst [vmem:[#allocation2 + $0x10] sm:$0xff] %v363
    %v365 = vld [vmem:[#allocation2] sm:$0xff]
    %v366 = vld [vmem:[#allocation2 + $0x8] sm:$0xff]
    %v367 = vld [vmem:[#allocation2 + $0x10] sm:$0xff]
    %s368 = smul.u32 384, 1
    %s369 = sshll.u32 %s368, 4
    %370 = dma.done %s68, %s369
    %v371 = vld [vmem:[#allocation5] sm:$0xff]
    %v372 = vld [vmem:[#allocation5 + $0x8] sm:$0xff]
    %v373 = vld [vmem:[#allocation5 + $0x10] sm:$0xff]
    %v374 = vld [vmem:[#allocation5 + $0x18] sm:$0xff]
    %v375 = vld [vmem:[#allocation5 + $0x20] sm:$0xff]
    %v376 = vld [vmem:[#allocation5 + $0x28] sm:$0xff]
    %v377 = vld [vmem:[#allocation5 + $0x30] sm:$0xff]
    %v378 = vld [vmem:[#allocation5 + $0x38] sm:$0xff]
    %v379 = vld [vmem:[#allocation5 + $0x40] sm:$0xff]
    %v380 = vld [vmem:[#allocation5 + $0x48] sm:$0xff]
    %v381 = vld [vmem:[#allocation5 + $0x50] sm:$0xff]
    %v382 = vld [vmem:[#allocation5 + $0x58] sm:$0xff]
    %v383 = vld [vmem:[#allocation5 + $0x60] sm:$0xff]
    %v384 = vld [vmem:[#allocation5 + $0x68] sm:$0xff]
    %v385 = vld [vmem:[#allocation5 + $0x70] sm:$0xff]
    %v386 = vld [vmem:[#allocation5 + $0x78] sm:$0xff]
    %v387 = vld [vmem:[#allocation5 + $0x80] sm:$0xff]
    %v388 = vld [vmem:[#allocation5 + $0x88] sm:$0xff]
    %v389 = vld [vmem:[#allocation5 + $0x90] sm:$0xff]
    %v390 = vld [vmem:[#allocation5 + $0x98] sm:$0xff]
    %v391 = vld [vmem:[#allocation5 + $0xa0] sm:$0xff]
    %v392 = vld [vmem:[#allocation5 + $0xa8] sm:$0xff]
    %v393 = vld [vmem:[#allocation5 + $0xb0] sm:$0xff]
    %v394 = vld [vmem:[#allocation5 + $0xb8] sm:$0xff]
    %v395 = vld [vmem:[#allocation5 + $0xc0] sm:$0xff]
    %v396 = vld [vmem:[#allocation5 + $0xc8] sm:$0xff]
    %v397 = vld [vmem:[#allocation5 + $0xd0] sm:$0xff]
    %v398 = vld [vmem:[#allocation5 + $0xd8] sm:$0xff]
    %v399 = vld [vmem:[#allocation5 + $0xe0] sm:$0xff]
    %v400 = vld [vmem:[#allocation5 + $0xe8] sm:$0xff]
    %v401 = vld [vmem:[#allocation5 + $0xf0] sm:$0xff]
    %v402 = vld [vmem:[#allocation5 + $0xf8] sm:$0xff]
    %v403 = vld [vmem:[#allocation5 + $0x100] sm:$0xff]
    %v404 = vld [vmem:[#allocation5 + $0x108] sm:$0xff]
    %v405 = vld [vmem:[#allocation5 + $0x110] sm:$0xff]
    %v406 = vld [vmem:[#allocation5 + $0x118] sm:$0xff]
    %v407 = vld [vmem:[#allocation5 + $0x120] sm:$0xff]
    %v408 = vld [vmem:[#allocation5 + $0x128] sm:$0xff]
    %v409 = vld [vmem:[#allocation5 + $0x130] sm:$0xff]
    %v410 = vld [vmem:[#allocation5 + $0x138] sm:$0xff]
    %v411 = vld [vmem:[#allocation5 + $0x140] sm:$0xff]
    %v412 = vld [vmem:[#allocation5 + $0x148] sm:$0xff]
    %v413 = vld [vmem:[#allocation5 + $0x150] sm:$0xff]
    %v414 = vld [vmem:[#allocation5 + $0x158] sm:$0xff]
    %v415 = vld [vmem:[#allocation5 + $0x160] sm:$0xff]
    %v416 = vld [vmem:[#allocation5 + $0x168] sm:$0xff]
    %v417 = vld [vmem:[#allocation5 + $0x170] sm:$0xff]
    %v418 = vld [vmem:[#allocation5 + $0x178] sm:$0xff]
    %v419 = vld [vmem:[%s10] sm:$0x1]
    %v421 = vlaneseq
    %v422 = vshrl.u32 %v421, 7
    %v423 = vsub.s32 0, %v422
    %v424 = vrot.slane %v419, %v423
    %426 = vmatprep.subr.mxu0 0.0
    %427 = vmatpush1.msra.mxu0 %v386
    %428 = vmatprep.subr.mxu0 0.0
    %429 = vmatpush1.msra.mxu0 %v385
    %430 = vmatprep.subr.mxu0 0.0
    %431 = vmatpush1.msra.mxu0 %v384
    %432 = vmatprep.subr.mxu0 0.0
    %433 = vmatpush1.msra.mxu0 %v383
    %434 = vmatprep.subr.mxu0 0.0
    %435 = vmatpush1.msra.mxu0 %v382
    %436 = vmatprep.subr.mxu0 0.0
    %437 = vmatpush1.msra.mxu0 %v381
    %438 = vmatprep.subr.mxu0 0.0
    %439 = vmatpush1.msra.mxu0 %v380
    %440 = vmatprep.subr.mxu0 0.0
    %441 = vmatpush1.msra.mxu0 %v379
    %442 = vmatprep.subr.mxu0 0.0
    %443 = vmatpush1.msra.mxu0 %v378
    %444 = vmatprep.subr.mxu0 0.0
    %445 = vmatpush1.msra.mxu0 %v377
    %446 = vmatprep.subr.mxu0 0.0
    %447 = vmatpush1.msra.mxu0 %v376
    %448 = vmatprep.subr.mxu0 0.0
    %449 = vmatpush1.msra.mxu0 %v375
    %450 = vmatprep.subr.mxu0 0.0
    %451 = vmatpush1.msra.mxu0 %v374
    %452 = vmatprep.subr.mxu0 0.0
    %453 = vmatpush1.msra.mxu0 %v373
    %454 = vmatprep.subr.mxu0 0.0
    %455 = vmatpush1.msra.mxu0 %v372
    %456 = vmatprep.subr.mxu0 0.0
    %457 = vmatpush1.msra.mxu0 %v371
    %458 = vmatprep.subr.mxu0 0.0
    %459 = vmatpush2.msra.mxu0 %v402
    %460 = vmatprep.subr.mxu0 0.0
    %461 = vmatpush2.msra.mxu0 %v401
    %462 = vmatprep.subr.mxu0 0.0
    %463 = vmatpush2.msra.mxu0 %v400
    %464 = vmatprep.subr.mxu0 0.0
    %465 = vmatpush2.msra.mxu0 %v399
    %466 = vmatprep.subr.mxu0 0.0
    %467 = vmatpush2.msra.mxu0 %v398
    %468 = vmatprep.subr.mxu0 0.0
    %469 = vmatpush2.msra.mxu0 %v397
    %470 = vmatprep.subr.mxu0 0.0
    %471 = vmatpush2.msra.mxu0 %v396
    %472 = vmatprep.subr.mxu0 0.0
    %473 = vmatpush2.msra.mxu0 %v395
    %474 = vmatprep.subr.mxu0 0.0
    %475 = vmatpush2.msra.mxu0 %v394
    %476 = vmatprep.subr.mxu0 0.0
    %477 = vmatpush2.msra.mxu0 %v393
    %478 = vmatprep.subr.mxu0 0.0
    %479 = vmatpush2.msra.mxu0 %v392
    %480 = vmatprep.subr.mxu0 0.0
    %481 = vmatpush2.msra.mxu0 %v391
    %482 = vmatprep.subr.mxu0 0.0
    %483 = vmatpush2.msra.mxu0 %v390
    %484 = vmatprep.subr.mxu0 0.0
    %485 = vmatpush2.msra.mxu0 %v389
    %486 = vmatprep.subr.mxu0 0.0
    %487 = vmatpush2.msra.mxu0 %v388
    %488 = vmatprep.subr.mxu0 0.0
    %489 = vmatpush2.msra.mxu0 %v387
    %490 = vmatprep.mubr.f32.mxu0 %v366
    %491 = vmatmul.mubr.f32.gmra.mxu0 %v365
    %v492 = vpop.f32.mrf.mxu0
    %v493 = vadd.f32 %v424, %v492
    %v494 = vpop.f32.mrf.mxu0
    %495 = vdwg.mxu0
    %496 = vmatprep.subr.mxu0 0.0
    %497 = vmatpush1.msra.mxu0 %v418
    %498 = vmatprep.subr.mxu0 0.0
    %499 = vmatpush1.msra.mxu0 %v417
    %500 = vmatprep.subr.mxu0 0.0
    %501 = vmatpush1.msra.mxu0 %v416
    %502 = vmatprep.subr.mxu0 0.0
    %503 = vmatpush1.msra.mxu0 %v415
    %504 = vmatprep.subr.mxu0 0.0
    %505 = vmatpush1.msra.mxu0 %v414
    %506 = vmatprep.subr.mxu0 0.0
    %507 = vmatpush1.msra.mxu0 %v413
    %508 = vmatprep.subr.mxu0 0.0
    %509 = vmatpush1.msra.mxu0 %v412
    %510 = vmatprep.subr.mxu0 0.0
    %511 = vmatpush1.msra.mxu0 %v411
    %512 = vmatprep.subr.mxu0 0.0
    %513 = vmatpush1.msra.mxu0 %v410
    %514 = vmatprep.subr.mxu0 0.0
    %515 = vmatpush1.msra.mxu0 %v409
    %516 = vmatprep.subr.mxu0 0.0
    %517 = vmatpush1.msra.mxu0 %v408
    %518 = vmatprep.subr.mxu0 0.0
    %519 = vmatpush1.msra.mxu0 %v407
    %520 = vmatprep.subr.mxu0 0.0
    %521 = vmatpush1.msra.mxu0 %v406
    %522 = vmatprep.subr.mxu0 0.0
    %523 = vmatpush1.msra.mxu0 %v405
    %524 = vmatprep.subr.mxu0 0.0
    %525 = vmatpush1.msra.mxu0 %v404
    %526 = vmatprep.subr.mxu0 0.0
    %527 = vmatpush1.msra.mxu0 %v403
    %528 = vmatprep.subr.mxu0 0.0
    %529 = vmatpush2.msra.mxu0 0.0
    %530 = vmatprep.subr.mxu0 0.0
    %531 = vmatpush2.msra.mxu0 0.0
    %532 = vmatprep.subr.mxu0 0.0
    %533 = vmatpush2.msra.mxu0 0.0
    %534 = vmatprep.subr.mxu0 0.0
    %535 = vmatpush2.msra.mxu0 0.0
    %536 = vmatprep.subr.mxu0 0.0
    %537 = vmatpush2.msra.mxu0 0.0
    %538 = vmatprep.subr.mxu0 0.0
    %539 = vmatpush2.msra.mxu0 0.0
    %540 = vmatprep.subr.mxu0 0.0
    %541 = vmatpush2.msra.mxu0 0.0
    %542 = vmatprep.subr.mxu0 0.0
    %543 = vmatpush2.msra.mxu0 0.0
    %544 = vmatprep.subr.mxu0 0.0
    %545 = vmatpush2.msra.mxu0 0.0
    %546 = vmatprep.subr.mxu0 0.0
    %547 = vmatpush2.msra.mxu0 0.0
    %548 = vmatprep.subr.mxu0 0.0
    %549 = vmatpush2.msra.mxu0 0.0
    %550 = vmatprep.subr.mxu0 0.0
    %551 = vmatpush2.msra.mxu0 0.0
    %552 = vmatprep.subr.mxu0 0.0
    %553 = vmatpush2.msra.mxu0 0.0
    %554 = vmatprep.subr.mxu0 0.0
    %555 = vmatpush2.msra.mxu0 0.0
    %556 = vmatprep.subr.mxu0 0.0
    %557 = vmatpush2.msra.mxu0 0.0
    %558 = vmatprep.subr.mxu0 0.0
    %559 = vmatpush2.msra.mxu0 0.0
    %560 = vmatprep.mubr.f32.mxu0 0.0
    %561 = vmatmul.mubr.f32.gmra.mxu0 %v367
    %v562 = vpop.f32.mrf.mxu0
    %v563 = vadd.f32 %v493, %v562
    %v564 = vpop.f32.mrf.mxu0
    %565 = vdwg.mxu0
    %v566 = vtanh.pop %v563
    %567 = vst [vmem:[#allocation10] sm:$0xff] %v566
    // Predicated region
    $region50: #{tpu_custom_call.1} parent=1 // pred_check
      _
    $region51: #{tpu_custom_call.1} parent=1 // pred_check_branch
      %569 = sbr.rel (0) target = $region53
    $region52: #{tpu_custom_call.1} parent=1 // pred_region
      %s571 = ssub.s32 128, 128
      %572 = vsyncadd [#allocation9], %s571
      %s574 = sshll.u32 [#allocation10], 4
      %s575 = int_to_ptr.vmem [resolvable:$true] %s574
      %577 = dma.vmem_to_hbm [thread:$0]  %s575, 128, %s11, [#allocation9]
    $region53: #{tpu_custom_call.1} parent=1 // pred_fallthru
      _
    // Predicated region
    $region54: #{tpu_custom_call.1} parent=1 // pred_check
      _
    $region55: #{tpu_custom_call.1} parent=1 // pred_check_branch
      %579 = sbr.rel (0) target = $region57
    $region56: #{tpu_custom_call.1} parent=1 // pred_region
      %580 = dma.done [#allocation9], 128
    $region57: #{tpu_custom_call.1} parent=1 // pred_fallthru
      _
    %581 = vsyncpa [#allocation8], 1
    %582 = vsyncpa [#allocation9], 1
  %583 = vsyncmov [#allocation6]
  %s584 = vpop.sfrf %583
  %p585 = scmp.eq.s32.totalorder %s584, 0
  %p586 = pneg %p585
  %588 = shalt.err (%p586)
  %s589 = scalar_lea.sflag [#allocation6], 1
  %590 = vsyncmov %s589
  %s591 = vpop.sfrf %590
  %p592 = scmp.eq.s32.totalorder %s591, 0
  %p593 = pneg %p592
  %595 = shalt.err (%p593)
  %s596 = scalar_lea.sflag [#allocation6], 2
  %597 = vsyncmov %s596
  %s598 = vpop.sfrf %597
  %p599 = scmp.eq.s32.totalorder %s598, 0
  %p600 = pneg %p599
  %602 = shalt.err (%p600)

</llo_original>
